<compile_context>
chip_gen: v7x
topology: tpu7x:2x2x1
jax: 0.10.0
libtpu: 0.0.40
codegen_flags: <defaults>
</compile_context>

<pallas_src>
import math
from functools import partial

import jax
import jax.numpy as jnp
from jax.experimental import pallas as pl
from jax.experimental.pallas import tpu as pltpu


# --------------------------------- kernels ----------------------------------

def _sdp_kernel_tiled(q_ref, k_ref, o_ref, *, scale):
    """q_ref (TB,TQ,D), k_ref (TB,TN,D), o_ref (TB,TQ,TN)."""
    s = jax.lax.dot_general(
        q_ref[...],
        k_ref[...],
        dimension_numbers=(((2,), (2,)), ((0,), (0,))),  # contract D, batch TB
        preferred_element_type=jnp.float32,
    )
    # Scale the f32 accumulator (one VPU mul per output elem, hidden under the
    # HBM store) rather than pre-scaling operands.
    o_ref[...] = (s * scale).astype(o_ref.dtype)


def _sdp_kernel_kslab(q_ref, k_ref, o_ref, *, scale, tn):
    """Keys are a per-batch resident slab (TB, N, D); the TN chunk for this
    grid step is sliced in-kernel, so K streams HBM->VMEM once per batch."""
    j = pl.program_id(2)
    start = pl.multiple_of(j * tn, tn)
    k = k_ref[:, pl.ds(start, tn), :]
    s = jax.lax.dot_general(
        q_ref[...],
        k,
        dimension_numbers=(((2,), (2,)), ((0,), (0,))),
        preferred_element_type=jnp.float32,
    )
    o_ref[...] = (s * scale).astype(o_ref.dtype)


# ------------------------------ tile selection -------------------------------

_TQ_CANDS = (1024, 512, 256, 128, 64, 32, 16, 8)    # sublane dim: multiples of 8
_TN_CANDS = (2048, 1024, 512, 256, 128)             # lane dim: multiples of 128


def _vmem_capacity_bytes():
    try:
        info = pltpu.get_tpu_info()
        cap = getattr(info, "vmem_capacity_bytes", None)
        if cap:
            return int(cap)
    except Exception:
        pass
    return 64 * 1024 * 1024  # conservative: v7x per-TC physical VMEM


def _working_set_bytes(tb, tq, tn, k_rows, d, itemsize):
    # Double-buffered (q tile + keys block + out tile).
    return 2 * itemsize * tb * (tq * d + k_rows * d + tq * tn)


def _choose_tiles(B, Q, N, D, itemsize, budget):
    tq_cands = [Q] + [t for t in _TQ_CANDS if t < Q]
    tn_cands = [N] + [t for t in _TN_CANDS if t < N]
    best = None
    for tq in tq_cands:
        for tn in tn_cands:
            ws = _working_set_bytes(1, tq, tn, tn, D, itemsize)
            if ws <= budget:
                key = (tq * tn, tn)  # largest tile; tie-break on lane-dense TN
                if best is None or key > best[0]:
                    best = (key, tq, tn)
    if best is None:
        tq, tn = min(Q, 8), min(N, 128)  # pathological D; minimal legal tiles
    else:
        _, tq, tn = best

    # Pack several batches per block when one batch is a single tile, to
    # amortize the ~0.35 us/step grid overhead on tiny per-batch work.
    tb = 1
    if tq >= Q and tn >= N:
        for cand in range(B, 1, -1):
            if B % cand == 0 and _working_set_bytes(cand, tq, tn, tn, D, itemsize) <= budget:
                tb = cand
                break

    # Resident-K-slab path: eliminates the Q/TQ-times re-fetch of keys.
    k_resident = (
        tn < N
        and N % tn == 0
        and _working_set_bytes(tb, tq, tn, N, D, itemsize) <= budget
    )
    return tb, tq, tn, k_resident


# --------------------------------- wrapper -----------------------------------

def scaled_dot_product_score(queries, keys, *, out_dtype=None,
                             tb=None, tq=None, tn=None, k_resident=None):
    """queries [B, Q, D], keys [B, N, D] -> scores [B, Q, N].

    out_dtype: set to jnp.bfloat16 to halve the dominant score writeback if
    the downstream consumer tolerates it; defaults to the input dtype to match
    the PyTorch module's numerics.
    """
    B, Q, D = queries.shape
    Bk, N, Dk = keys.shape
    assert B == Bk and D == Dk
    scale = 1.0 / math.sqrt(D)
    out_dtype = queries.dtype if out_dtype is None else out_dtype

    itemsize = jnp.dtype(queries.dtype).itemsize
    cap = _vmem_capacity_bytes()
    budget = int(cap * 0.40)  # keeps v7x (64 MiB physical) safe, lets v5e/v6e go big

    a_tb, a_tq, a_tn, a_res = _choose_tiles(B, Q, N, D, itemsize, budget)
    TB = a_tb if tb is None else tb
    TQ = a_tq if tq is None else tq
    TN = a_tn if tn is None else tn
    use_kslab = a_res if k_resident is None else k_resident

    if use_kslab:
        kernel = partial(_sdp_kernel_kslab, scale=scale, tn=TN)
        # Constant block index across (i, j): Pallas skips the DMA, so the
        # keys slab is fetched exactly once per batch block.
        k_spec = pl.BlockSpec((TB, N, D), lambda b, i, j: (b, 0, 0))
        k_rows = N
    else:
        kernel = partial(_sdp_kernel_tiled, scale=scale)
        k_spec = pl.BlockSpec((TB, TN, D), lambda b, i, j: (b, j, 0))
        k_rows = TN

    ws = _working_set_bytes(TB, TQ, TN, k_rows, D, itemsize)
    # Raise the scoped VMEM limit past v5e's 16 MiB default; never exceed the
    # physical capacity (matters on v7x's 64 MiB).
    vmem_limit = int(min(cap, max(32 * 1024 * 1024, ws + 8 * 1024 * 1024)))

    # N-tile axis innermost: Q tile (and the K slab) stay resident in VMEM.
    grid = (pl.cdiv(B, TB), pl.cdiv(Q, TQ), pl.cdiv(N, TN))

    return pl.pallas_call(
        kernel,
        out_shape=jax.ShapeDtypeStruct((B, Q, N), out_dtype),
        grid_spec=pltpu.PrefetchScalarGridSpec(
            num_scalar_prefetch=0,
            grid=grid,
            in_specs=[
                pl.BlockSpec((TB, TQ, D), lambda b, i, j: (b, i, 0)),
                k_spec,
            ],
            out_specs=pl.BlockSpec((TB, TQ, TN), lambda b, i, j: (b, i, j)),
        ),
        compiler_params=pltpu.CompilerParams(
            # Every grid point writes a distinct output tile -> fully parallel.
            # TODO(synk): verify cross-TC sharding on v7x in a profile; if one
            #   core is idle, try pltpu.CORE_PARALLEL on the leading axis.
            dimension_semantics=("parallel", "parallel", "parallel"),
            vmem_limit_bytes=vmem_limit,
        ),
    )(queries, keys)


def scaled_dot_product_score_ref(queries, keys):
    # Pure-JAX reference matching torch.bmm(q, k.transpose(1,2)) / sqrt(dim).
    scale = 1.0 / math.sqrt(keys.shape[2])
    return jnp.einsum("bqd,bnd->bqn", queries, keys) * scale


if __name__ == "__main__":
    key = jax.random.PRNGKey(0)

    # 1) Small shape matching the module's convention (batch x seq x dim);
    #    exercises the TB-batched single-tile path.
    kq, kk = jax.random.split(key)
    B, Q, N, D = 2, 8, 8, 32
    queries = jax.random.normal(kq, (B, Q, D), dtype=jnp.float32)
    keys = jax.random.normal(kk, (B, N, D), dtype=jnp.float32)
    out = scaled_dot_product_score(queries, keys)
    jax.block_until_ready(out)
    ref = scaled_dot_product_score_ref(queries, keys)
    assert out.shape == (B, Q, N)
    assert jnp.allclose(out, ref, atol=1e-5, rtol=1e-5)

    # 2) Modest shape (auto tile pick: one (2, 384, 384) block per grid step).
    kq2, kk2 = jax.random.split(jax.random.PRNGKey(1))
    B2, Q2, N2, D2 = 2, 384, 384, 64
    q2 = jax.random.normal(kq2, (B2, Q2, D2), dtype=jnp.float32)
    k2 = jax.random.normal(kk2, (B2, N2, D2), dtype=jnp.float32)
    out2 = scaled_dot_product_score(q2, k2)
    jax.block_until_ready(out2)
    ref2 = scaled_dot_product_score_ref(q2, k2)
    assert out2.shape == (B2, Q2, N2)
    assert jnp.allclose(out2, ref2, atol=1e-4, rtol=1e-4)

    # 3) Explicitly exercise the tiled multi-block path (TN < N, tiled K).
    kq3, kk3 = jax.random.split(jax.random.PRNGKey(2))
    B3, Q3, N3, D3 = 1, 256, 256, 32
    q3 = jax.random.normal(kq3, (B3, Q3, D3), dtype=jnp.float32)
    k3 = jax.random.normal(kk3, (B3, N3, D3), dtype=jnp.float32)
    out3 = scaled_dot_product_score(q3, k3, tb=1, tq=128, tn=128, k_resident=False)
    jax.block_until_ready(out3)
    ref3 = scaled_dot_product_score_ref(q3, k3)
    assert jnp.allclose(out3, ref3, atol=1e-4, rtol=1e-4)

    # 4) Explicitly exercise the resident-K-slab path (K DMA'd once per batch).
    kq4, kk4 = jax.random.split(jax.random.PRNGKey(3))
    B4, Q4, N4, D4 = 2, 256, 512, 64
    q4 = jax.random.normal(kq4, (B4, Q4, D4), dtype=jnp.float32)
    k4 = jax.random.normal(kk4, (B4, N4, D4), dtype=jnp.float32)
    out4 = scaled_dot_product_score(q4, k4, tb=1, tq=256, tn=256, k_resident=True)
    jax.block_until_ready(out4)
    ref4 = scaled_dot_product_score_ref(q4, k4)
    assert jnp.allclose(out4, ref4, atol=1e-4, rtol=1e-4)

    print("KERNEL_OK")
</pallas_src>

<mosaic_0001>
module attributes {stable_mosaic.version = 11 : i64} {
  func.func @_sdp_kernel_tiled(%arg0: i32, %arg1: i32, %arg2: i32, %arg3: memref<2x8x32xf32, #tpu.memory_space<vmem>>, %arg4: memref<2x8x32xf32, #tpu.memory_space<vmem>>, %arg5: memref<2x8x8xf32, #tpu.memory_space<vmem>>) attributes {dimension_semantics = [#tpu.dimension_semantics<parallel>, #tpu.dimension_semantics<parallel>, #tpu.dimension_semantics<parallel>], iteration_bounds = array<i64: 1, 1, 1>, scalar_prefetch = 0 : i64, scratch_operands = 0 : i64, tpu.core_type = #tpu.core_type<tc>, window_params = [{transform_indices = @transform_0, window_bounds = array<i64: 2, 8, 32>}, {transform_indices = @transform_1, window_bounds = array<i64: 2, 8, 32>}, {transform_indices = @transform_2, window_bounds = array<i64: 2, 8, 8>}]} {
    %c0 = arith.constant 0 : index
    %c0_0 = arith.constant 0 : index
    %c0_1 = arith.constant 0 : index
    %0 = vector.load %arg3[%c0, %c0_0, %c0_1] : memref<2x8x32xf32, #tpu.memory_space<vmem>>, vector<2x8x32xf32>
    %c0_2 = arith.constant 0 : index
    %c0_3 = arith.constant 0 : index
    %c0_4 = arith.constant 0 : index
    %1 = vector.load %arg4[%c0_2, %c0_3, %c0_4] : memref<2x8x32xf32, #tpu.memory_space<vmem>>, vector<2x8x32xf32>
    %cst = arith.constant dense<0.000000e+00> : vector<2x8x8xf32>
    %2 = tpu.matmul %0, %1, %cst {dimension_numbers = #tpu.dot_dimension_numbers<[2], [2], [1], [1], [0, 0, 0, 1, 1, 1], [0], [0]>} : vector<2x8x32xf32>, vector<2x8x32xf32>, vector<2x8x8xf32> -> vector<2x8x8xf32>
    %cst_5 = arith.constant 0.176776692 : f32
    %3 = vector.broadcast %cst_5 : f32 to vector<2x8x8xf32>
    %4 = arith.mulf %2, %3 : vector<2x8x8xf32>
    %c0_6 = arith.constant 0 : index
    %c0_7 = arith.constant 0 : index
    %c0_8 = arith.constant 0 : index
    %5 = vector.load %arg5[%c0_6, %c0_7, %c0_8] : memref<2x8x8xf32, #tpu.memory_space<vmem>>, vector<2x8x8xf32>
    tpu.vector_store %arg5[%c0_6, %c0_7, %c0_8], %4 {strides = array<i32>} : memref<2x8x8xf32, #tpu.memory_space<vmem>>, vector<2x8x8xf32>,
    return
  }
  func.func @transform_0(%arg0: i32, %arg1: i32, %arg2: i32) -> (i32, i32, i32) {
    %c0_i32 = arith.constant 0 : i32
    %c0_i32_0 = arith.constant 0 : i32
    return %arg0, %arg1, %c0_i32 : i32, i32, i32
  }
  func.func @transform_1(%arg0: i32, %arg1: i32, %arg2: i32) -> (i32, i32, i32) {
    %c0_i32 = arith.constant 0 : i32
    %c0_i32_0 = arith.constant 0 : i32
    return %arg0, %arg2, %c0_i32 : i32, i32, i32
  }
  func.func @transform_2(%arg0: i32, %arg1: i32, %arg2: i32) -> (i32, i32, i32) {
    %c0_i32 = arith.constant 0 : i32
    return %arg0, %arg1, %arg2 : i32, i32, i32
  }
}

</mosaic_0001>

<llo_original>
// kernel: tpu_custom_call.1
$region0: #{tpu_custom_call.1}
  #allocation0 [shape = 'u32[]', space=smem, size = 0x4, offset = 0x4, fixed_abs, tag = 'smem constant byte address 0x4 - core index']
  #allocation1 [shape = 'u32[144,128]{1,0:T(1,128)}', space=vmem, size = 0x12000, scoped, tag = 'internal scratch']
  %s0 = inlined_call_operand.hbm [shape: f32[2,8,32], index: 0, kind: input, shape index: {}]
  %s1 = inlined_call_operand.hbm [shape: f32[2,8,32], index: 1, kind: input, shape index: {}]
  %s2 = inlined_call_operand.hbm [shape: f32[2,8,8], index: 2, kind: output, shape index: {}]
  %s3 = sld [smem:[#allocation0]]
  $region26: #{tpu_custom_call.1} parent=0
    _
  %s5 = ssub.s32 1, %s3
  %s6 = scalar_select 0, %s5, %s3
  $region1: #{tpu_custom_call.1} parent=0
    #allocation2 [shape = 'u8[8192]{0}', space=vmem, size = 0x2000, scoped, tag = 'input window, operand 0, single buffered']
    #allocation3 [shape = 's32[1]{0}', space=sflag, size = 0x4, scoped, tag = 'scoped memory for tpu_custom_call.1']
    #allocation4 [shape = 's32[1]{0}', space=sflag, size = 0x4, scoped, tag = 'scoped memory for tpu_custom_call.1']
    #allocation5 [shape = 'u8[8192]{0}', space=vmem, size = 0x2000, scoped, tag = 'input window, operand 1, single buffered']
    #allocation6 [shape = 's32[1]{0}', space=sflag, size = 0x4, scoped, tag = 'scoped memory for tpu_custom_call.1']
    #allocation7 [shape = 'u8[8192]{0}', space=vmem, size = 0x2000, scoped, tag = 'output window, operand 0, single buffered']
    %7 = vsyncpa [#allocation3], 0
    %8 = vsyncpa [#allocation6], 0
    %9 = vsyncpa [#allocation4], 0
    // Predicated region
    $region2: #{tpu_custom_call.1} parent=1 // pred_check
      _
    $region3: #{tpu_custom_call.1} parent=1 // pred_check_branch
      %11 = sbr.rel (0) target = $region5
    $region4: #{tpu_custom_call.1} parent=1 // pred_region
      %s13 = ssub.s32 256, 256
      %14 = vsyncadd [#allocation3], %s13
      %s15 = sshll.u32 [#allocation2], 4
      %s16 = int_to_ptr.vmem [resolvable:$true] %s15
      %21 = dma.hbm_to_vmem [thread:$0]  %s0, 256, %s16, [#allocation3], 128, 128, 8
    $region5: #{tpu_custom_call.1} parent=1 // pred_fallthru
      _
    // Predicated region
    $region6: #{tpu_custom_call.1} parent=1 // pred_check
      _
    $region7: #{tpu_custom_call.1} parent=1 // pred_check_branch
      %23 = sbr.rel (0) target = $region9
    $region8: #{tpu_custom_call.1} parent=1 // pred_region
      %s25 = ssub.s32 256, 256
      %26 = vsyncadd [#allocation6], %s25
      %s27 = sshll.u32 [#allocation5], 4
      %s28 = int_to_ptr.vmem [resolvable:$true] %s27
      %33 = dma.hbm_to_vmem [thread:$0]  %s1, 256, %s28, [#allocation6], 128, 128, 8
    $region9: #{tpu_custom_call.1} parent=1 // pred_fallthru
      _
    // Predicated region
    $region10: #{tpu_custom_call.1} parent=1 // pred_check
      _
    $region11: #{tpu_custom_call.1} parent=1 // pred_check_branch
      %35 = sbr.rel (0) target = $region13
    $region12: #{tpu_custom_call.1} parent=1 // pred_region
      %36 = dma.done [#allocation3], 256
    $region13: #{tpu_custom_call.1} parent=1 // pred_fallthru
      _
    // Predicated region
    $region14: #{tpu_custom_call.1} parent=1 // pred_check
      _
    $region15: #{tpu_custom_call.1} parent=1 // pred_check_branch
      %38 = sbr.rel (0) target = $region17
    $region16: #{tpu_custom_call.1} parent=1 // pred_region
      %39 = dma.done [#allocation6], 256
    $region17: #{tpu_custom_call.1} parent=1 // pred_fallthru
      _
    %v40 = vld [vmem:[#allocation2] sm:$0xff]
    %v41 = vld [vmem:[#allocation2 + $0x8] sm:$0xff]
    %v42 = vld [vmem:[#allocation5] sm:$0xff]
    %v43 = vld [vmem:[#allocation5 + $0x8] sm:$0xff]
    %vm44 = vcmask 261120
    %v46 = vsel %vm44, %v40, 0
    %v49 = vsel %vm44, %v42, 0
    %51 = vmatprep.subr.mxu0 0.0
    %52 = vmatpush1.xpose.msra.mxu0 %v49
    %53 = vmatprep.subr.mxu0 0.0
    %54 = vmatpush1.xpose.msra.mxu0 0.0
    %55 = vmatprep.subr.mxu0 0.0
    %56 = vmatpush1.xpose.msra.mxu0 0.0
    %57 = vmatprep.subr.mxu0 0.0
    %58 = vmatpush1.xpose.msra.mxu0 0.0
    %59 = vmatprep.subr.mxu0 0.0
    %60 = vmatpush1.xpose.msra.mxu0 0.0
    %61 = vmatprep.subr.mxu0 0.0
    %62 = vmatpush1.xpose.msra.mxu0 0.0
    %63 = vmatprep.subr.mxu0 0.0
    %64 = vmatpush1.xpose.msra.mxu0 0.0
    %65 = vmatprep.subr.mxu0 0.0
    %66 = vmatpush1.xpose.msra.mxu0 0.0
    %67 = vmatprep.subr.mxu0 0.0
    %68 = vmatpush1.xpose.msra.mxu0 0.0
    %69 = vmatprep.subr.mxu0 0.0
    %70 = vmatpush1.xpose.msra.mxu0 0.0
    %71 = vmatprep.subr.mxu0 0.0
    %72 = vmatpush1.xpose.msra.mxu0 0.0
    %73 = vmatprep.subr.mxu0 0.0
    %74 = vmatpush1.xpose.msra.mxu0 0.0
    %75 = vmatprep.subr.mxu0 0.0
    %76 = vmatpush1.xpose.msra.mxu0 0.0
    %77 = vmatprep.subr.mxu0 0.0
    %78 = vmatpush1.xpose.msra.mxu0 0.0
    %79 = vmatprep.subr.mxu0 0.0
    %80 = vmatpush1.xpose.msra.mxu0 0.0
    %81 = vmatprep.subr.mxu0 0.0
    %82 = vmatpush1.xpose.msra.mxu0 0.0
    %83 = vmatprep.subr.mxu0 0.0
    %84 = vmatpush1.xpose.msra.mxu0 0.0
    %85 = vmatprep.subr.mxu0 0.0
    %86 = vmatpush1.xpose.msra.mxu0 0.0
    %87 = vmatprep.subr.mxu0 0.0
    %88 = vmatpush1.xpose.msra.mxu0 0.0
    %89 = vmatprep.subr.mxu0 0.0
    %90 = vmatpush1.xpose.msra.mxu0 0.0
    %91 = vmatprep.subr.mxu0 0.0
    %92 = vmatpush1.xpose.msra.mxu0 0.0
    %93 = vmatprep.subr.mxu0 0.0
    %94 = vmatpush1.xpose.msra.mxu0 0.0
    %95 = vmatprep.subr.mxu0 0.0
    %96 = vmatpush1.xpose.msra.mxu0 0.0
    %97 = vmatprep.subr.mxu0 0.0
    %98 = vmatpush1.xpose.msra.mxu0 0.0
    %99 = vmatprep.subr.mxu0 0.0
    %100 = vmatpush1.xpose.msra.mxu0 0.0
    %101 = vmatprep.subr.mxu0 0.0
    %102 = vmatpush1.xpose.msra.mxu0 0.0
    %103 = vmatprep.subr.mxu0 0.0
    %104 = vmatpush1.xpose.msra.mxu0 0.0
    %105 = vmatprep.subr.mxu0 0.0
    %106 = vmatpush1.xpose.msra.mxu0 0.0
    %107 = vmatprep.subr.mxu0 0.0
    %108 = vmatpush1.xpose.msra.mxu0 0.0
    %109 = vmatprep.subr.mxu0 0.0
    %110 = vmatpush1.xpose.msra.mxu0 0.0
    %111 = vmatprep.subr.mxu0 0.0
    %112 = vmatpush1.xpose.msra.mxu0 0.0
    %113 = vmatprep.subr.mxu0 0.0
    %114 = vmatpush1.xpose.msra.mxu0 0.0
    %115 = vmatprep.mubr.f32.mxu0 0.0
    %116 = vmatmul.mubr.f32.gmra.mrb[0].mxu0 %v46
    %v117 = vpop.f32.mrb[0].mxu0
    %v118 = vadd.f32 0.0, %v117
    %v119 = vpop.f32.mrb[0].mxu0
    %120 = vdwg.mxu0
    %v122 = vsel %vm44, %v41, 0
    %v125 = vsel %vm44, %v43, 0
    %127 = vmatprep.subr.mxu0 0.0
    %128 = vmatpush1.xpose.msra.mxu0 %v125
    %129 = vmatprep.subr.mxu0 0.0
    %130 = vmatpush1.xpose.msra.mxu0 0.0
    %131 = vmatprep.subr.mxu0 0.0
    %132 = vmatpush1.xpose.msra.mxu0 0.0
    %133 = vmatprep.subr.mxu0 0.0
    %134 = vmatpush1.xpose.msra.mxu0 0.0
    %135 = vmatprep.subr.mxu0 0.0
    %136 = vmatpush1.xpose.msra.mxu0 0.0
    %137 = vmatprep.subr.mxu0 0.0
    %138 = vmatpush1.xpose.msra.mxu0 0.0
    %139 = vmatprep.subr.mxu0 0.0
    %140 = vmatpush1.xpose.msra.mxu0 0.0
    %141 = vmatprep.subr.mxu0 0.0
    %142 = vmatpush1.xpose.msra.mxu0 0.0
    %143 = vmatprep.subr.mxu0 0.0
    %144 = vmatpush1.xpose.msra.mxu0 0.0
    %145 = vmatprep.subr.mxu0 0.0
    %146 = vmatpush1.xpose.msra.mxu0 0.0
    %147 = vmatprep.subr.mxu0 0.0
    %148 = vmatpush1.xpose.msra.mxu0 0.0
    %149 = vmatprep.subr.mxu0 0.0
    %150 = vmatpush1.xpose.msra.mxu0 0.0
    %151 = vmatprep.subr.mxu0 0.0
    %152 = vmatpush1.xpose.msra.mxu0 0.0
    %153 = vmatprep.subr.mxu0 0.0
    %154 = vmatpush1.xpose.msra.mxu0 0.0
    %155 = vmatprep.subr.mxu0 0.0
    %156 = vmatpush1.xpose.msra.mxu0 0.0
    %157 = vmatprep.subr.mxu0 0.0
    %158 = vmatpush1.xpose.msra.mxu0 0.0
    %159 = vmatprep.subr.mxu0 0.0
    %160 = vmatpush1.xpose.msra.mxu0 0.0
    %161 = vmatprep.subr.mxu0 0.0
    %162 = vmatpush1.xpose.msra.mxu0 0.0
    %163 = vmatprep.subr.mxu0 0.0
    %164 = vmatpush1.xpose.msra.mxu0 0.0
    %165 = vmatprep.subr.mxu0 0.0
    %166 = vmatpush1.xpose.msra.mxu0 0.0
    %167 = vmatprep.subr.mxu0 0.0
    %168 = vmatpush1.xpose.msra.mxu0 0.0
    %169 = vmatprep.subr.mxu0 0.0
    %170 = vmatpush1.xpose.msra.mxu0 0.0
    %171 = vmatprep.subr.mxu0 0.0
    %172 = vmatpush1.xpose.msra.mxu0 0.0
    %173 = vmatprep.subr.mxu0 0.0
    %174 = vmatpush1.xpose.msra.mxu0 0.0
    %175 = vmatprep.subr.mxu0 0.0
    %176 = vmatpush1.xpose.msra.mxu0 0.0
    %177 = vmatprep.subr.mxu0 0.0
    %178 = vmatpush1.xpose.msra.mxu0 0.0
    %179 = vmatprep.subr.mxu0 0.0
    %180 = vmatpush1.xpose.msra.mxu0 0.0
    %181 = vmatprep.subr.mxu0 0.0
    %182 = vmatpush1.xpose.msra.mxu0 0.0
    %183 = vmatprep.subr.mxu0 0.0
    %184 = vmatpush1.xpose.msra.mxu0 0.0
    %185 = vmatprep.subr.mxu0 0.0
    %186 = vmatpush1.xpose.msra.mxu0 0.0
    %187 = vmatprep.subr.mxu0 0.0
    %188 = vmatpush1.xpose.msra.mxu0 0.0
    %189 = vmatprep.subr.mxu0 0.0
    %190 = vmatpush1.xpose.msra.mxu0 0.0
    %191 = vmatprep.mubr.f32.mxu0 0.0
    %192 = vmatmul.mubr.f32.gmra.mrb[0].mxu0 %v122
    %v193 = vpop.f32.mrb[0].mxu0
    %v194 = vadd.f32 0.0, %v193
    %v195 = vpop.f32.mrb[0].mxu0
    %196 = vdwg.mxu0
    %v197 = vmul.f32 %v118, 0.17677669
    %v198 = vmul.f32 %v194, 0.17677669
    %vm199 = vcmask 64512
    %200 = vst.msk [vmem:[#allocation7] sm:$0xff] %vm199, %v197
    %201 = vst.msk [vmem:[#allocation7 + $0x8] sm:$0xff] %vm199, %v198
    // Predicated region
    $region18: #{tpu_custom_call.1} parent=1 // pred_check
      _
    $region19: #{tpu_custom_call.1} parent=1 // pred_check_branch
      %203 = sbr.rel (0) target = $region21
    $region20: #{tpu_custom_call.1} parent=1 // pred_region
      %s205 = ssub.s32 256, 256
      %206 = vsyncadd [#allocation4], %s205
      %s207 = sshll.u32 [#allocation7], 4
      %s208 = int_to_ptr.vmem [resolvable:$true] %s207
      %213 = dma.vmem_to_hbm [thread:$0]  %s208, 256, %s2, [#allocation4], 128, 128, 8
    $region21: #{tpu_custom_call.1} parent=1 // pred_fallthru
      _
    // Predicated region
    $region22: #{tpu_custom_call.1} parent=1 // pred_check
      _
    $region23: #{tpu_custom_call.1} parent=1 // pred_check_branch
      %215 = sbr.rel (0) target = $region25
    $region24: #{tpu_custom_call.1} parent=1 // pred_region
      %216 = dma.done [#allocation4], 256
    $region25: #{tpu_custom_call.1} parent=1 // pred_fallthru
      _
    %217 = vsyncpa [#allocation3], 1
    %218 = vsyncpa [#allocation6], 1
    %219 = vsyncpa [#allocation4], 1

</llo_original>
